<compile_context>
chip_gen: v7x
topology: tpu7x:2x2x1
jax: 0.10.0
libtpu: 0.0.40
codegen_flags: <defaults>
</compile_context>

<pallas_src>
import math

import jax
import jax.numpy as jnp
from jax.experimental import pallas as pl
from jax.experimental.pallas import tpu as pltpu


# ----------------------------- Pallas kernel --------------------------------

def _gelu_kernel(x_ref, o_ref):
    """Elementwise tanh-approx GELU on one VMEM tile (f32 math, cast on store)."""
    x = x_ref[...].astype(jnp.float32)
    c = math.sqrt(2.0 / math.pi)
    y = 0.5 * x * (1.0 + jnp.tanh(c * (x + 0.044715 * (x * x * x))))
    o_ref[...] = y.astype(o_ref.dtype)


def _gelu_jax(x: jax.Array) -> jax.Array:
    """Plain-JAX tanh-approx GELU (used only for the <128-element tail)."""
    xf = x.astype(jnp.float32)
    c = math.sqrt(2.0 / math.pi)
    y = 0.5 * xf * (1.0 + jnp.tanh(c * (xf + 0.044715 * (xf * xf * xf))))
    return y.astype(x.dtype)


_LANE_CANDIDATES = (8192, 4096, 2048, 1024, 512, 256, 128)
# ~4 MiB per block -> in + out, double-buffered ~= 16 MiB live VMEM.  Explicit
# vmem_limit_bytes=32 MiB keeps that comfortable on v5e (128 MiB physical),
# v6e (128 MiB) and v7x (64 MiB physical / 32 MiB scoped default).
_TARGET_BLOCK_BYTES = 4 * 1024 * 1024
_VMEM_LIMIT_BYTES = 32 * 1024 * 1024


def _pallas_gelu_lane_dense(x2: jax.Array) -> jax.Array:
    """Runs the GELU kernel on a (rows, lane) lane-dense (lane % 128 == 0) view."""
    rows, lane = x2.shape
    itemsize = x2.dtype.itemsize

    if rows <= 8:
        # Full extent on the sublane axis (block == array dims is always legal).
        row_tile = rows
    else:
        target_rows = max(8, _TARGET_BLOCK_BYTES // (lane * itemsize))
        row_tile = min(target_rows, rows)
        row_tile = max(8, (row_tile // 8) * 8)
        # v7x megacore: keep >= 2 grid steps so both TensorCores get work.
        if rows >= 16 and pl.cdiv(rows, row_tile) < 2:
            row_tile = max(8, ((rows // 2) // 8) * 8)

    grid = (pl.cdiv(rows, row_tile),)

    n = rows * lane
    cost = pl.CostEstimate(
        flops=8 * n,
        transcendentals=n,
        bytes_accessed=2 * n * itemsize,
    )

    return pl.pallas_call(
        _gelu_kernel,
        out_shape=jax.ShapeDtypeStruct(x2.shape, x2.dtype),
        grid_spec=pl.GridSpec(
            grid=grid,
            in_specs=[pl.BlockSpec((row_tile, lane), lambda i: (i, 0))],
            out_specs=pl.BlockSpec((row_tile, lane), lambda i: (i, 0)),
        ),
        compiler_params=pltpu.CompilerParams(
            dimension_semantics=("parallel",),
            vmem_limit_bytes=_VMEM_LIMIT_BYTES,
        ),
        cost_estimate=cost,
    )(x2)


def pallas_gelu(x: jax.Array) -> jax.Array:
    """GELU (tanh approx) applied elementwise via a tiled Pallas TPU kernel.

    Accepts any shape (*, d_model); returns the same shape and dtype.
    """
    orig_shape = x.shape
    n = x.size
    if n == 0:
        return x

    flat = x.reshape(-1)

    # Lane-dense main part: largest prefix whose size is a multiple of 128.
    n_main = (n // 128) * 128
    if n_main == 0:
        # Tiny tensor (<128 elements): not worth a kernel launch.
        return _gelu_jax(x)

    # Fold the main part into (rows, lane) with lane the largest candidate
    # multiple of 128 dividing it -> full-width unmasked vst stores.
    lane = 128
    for cand in _LANE_CANDIDATES:
        if n_main % cand == 0:
            lane = cand
            break
    main = flat[:n_main].reshape(-1, lane)
    main_out = _pallas_gelu_lane_dense(main).reshape(-1)

    if n_main == n:
        out_flat = main_out
    else:
        # <128-element tail handled in plain JAX (avoids masked partial stores
        # over the whole tensor, which was the old fallback's behavior).
        tail_out = _gelu_jax(flat[n_main:])
        out_flat = jnp.concatenate([main_out, tail_out])

    return out_flat.reshape(orig_shape)


# ----------------------------- LambdaWrapper ---------------------------------

class LambdaWrapper:
    """JAX/Pallas equivalent of the PyTorch LambdaWrapper module.

    Wraps a callable so it can be composed like a module (e.g. inside a
    ResidualBlock).  forward(x) == lambda_func(x), same shape as input.
    """

    def __init__(self, lambda_func):
        self.lambda_func = lambda_func

    def __call__(self, x: jax.Array) -> jax.Array:
        return self.forward(x)

    def forward(self, x: jax.Array) -> jax.Array:
        return self.lambda_func(x)


# --------------------------------- main --------------------------------------

if __name__ == "__main__":
    key = jax.random.PRNGKey(0)
    module = LambdaWrapper(pallas_gelu)

    # (*, d_model): batch=2, seq=8, d_model=32  (total 512 = 4 * 128 -> lane-dense path)
    x = jax.random.normal(key, (2, 8, 32), dtype=jnp.float32)
    y = jax.block_until_ready(module(x))
    y_ref = jax.nn.gelu(x, approximate=True)
    assert y.shape == x.shape and y.dtype == x.dtype
    assert jnp.allclose(y, y_ref, atol=1e-5, rtol=1e-5)

    # Non-multiple-of-128 total size (2*7*33 = 462): exercises main + JAX tail path.
    x2 = jax.random.normal(jax.random.PRNGKey(1), (2, 7, 33), dtype=jnp.float32)
    y2 = jax.block_until_ready(module(x2))
    y2_ref = jax.nn.gelu(x2, approximate=True)
    assert y2.shape == x2.shape and y2.dtype == x2.dtype
    assert jnp.allclose(y2, y2_ref, atol=1e-5, rtol=1e-5)

    print("KERNEL_OK")
</pallas_src>

<mosaic_0001>
module attributes {stable_mosaic.version = 11 : i64} {
  func.func @_gelu_kernel(%arg0: i32, %arg1: memref<1x512xf32, #tpu.memory_space<vmem>>, %arg2: memref<1x512xf32, #tpu.memory_space<vmem>>) attributes {dimension_semantics = [#tpu.dimension_semantics<parallel>], iteration_bounds = array<i64: 1>, scalar_prefetch = 0 : i64, scratch_operands = 0 : i64, tpu.core_type = #tpu.core_type<tc>, window_params = [{transform_indices = @transform_0, window_bounds = array<i64: 1, 512>}, {transform_indices = @transform_1, window_bounds = array<i64: 1, 512>}]} {
    %c0 = arith.constant 0 : index
    %c0_0 = arith.constant 0 : index
    %0 = vector.load %arg1[%c0, %c0_0] : memref<1x512xf32, #tpu.memory_space<vmem>>, vector<1x512xf32>
    %cst = arith.constant 5.000000e-01 : f32
    %1 = vector.broadcast %cst : f32 to vector<1x512xf32>
    %2 = arith.mulf %1, %0 : vector<1x512xf32>
    %3 = arith.mulf %0, %0 : vector<1x512xf32>
    %4 = arith.mulf %3, %0 : vector<1x512xf32>
    %cst_1 = arith.constant 4.471500e-02 : f32
    %5 = vector.broadcast %cst_1 : f32 to vector<1x512xf32>
    %6 = arith.mulf %5, %4 : vector<1x512xf32>
    %7 = arith.addf %0, %6 : vector<1x512xf32>
    %cst_2 = arith.constant 0.797884583 : f32
    %8 = vector.broadcast %cst_2 : f32 to vector<1x512xf32>
    %9 = arith.mulf %8, %7 : vector<1x512xf32>
    %10 = math.tanh %9 : vector<1x512xf32>
    %cst_3 = arith.constant 1.000000e+00 : f32
    %11 = vector.broadcast %cst_3 : f32 to vector<1x512xf32>
    %12 = arith.addf %11, %10 : vector<1x512xf32>
    %13 = arith.mulf %2, %12 : vector<1x512xf32>
    %c0_4 = arith.constant 0 : index
    %c0_5 = arith.constant 0 : index
    %14 = vector.load %arg2[%c0_4, %c0_5] : memref<1x512xf32, #tpu.memory_space<vmem>>, vector<1x512xf32>
    tpu.vector_store %arg2[%c0_4, %c0_5], %13 {strides = array<i32>} : memref<1x512xf32, #tpu.memory_space<vmem>>, vector<1x512xf32>,
    return
  }
  func.func @transform_0(%arg0: i32) -> (i32, i32) {
    %c0_i32 = arith.constant 0 : i32
    %c0_i32_0 = arith.constant 0 : i32
    return %arg0, %c0_i32 : i32, i32
  }
  func.func @transform_1(%arg0: i32) -> (i32, i32) {
    %c0_i32 = arith.constant 0 : i32
    %c0_i32_0 = arith.constant 0 : i32
    return %arg0, %c0_i32 : i32, i32
  }
}

</mosaic_0001>

<llo_original>
// kernel: tpu_custom_call.1
$region0: #{tpu_custom_call.1}
  #allocation0 [shape = 'u32[]', space=smem, size = 0x4, offset = 0x4, fixed_abs, tag = 'smem constant byte address 0x4 - core index']
  #allocation1 [shape = 'u32[144,128]{1,0:T(1,128)}', space=vmem, size = 0x12000, scoped, tag = 'internal scratch']
  %s0 = inlined_call_operand.hbm [shape: f32[1,512], index: 0, kind: input, shape index: {}]
  %s1 = inlined_call_operand.hbm [shape: f32[1,512], index: 1, kind: output, shape index: {}]
  %s2 = sld [smem:[#allocation0]]
  $region18: #{tpu_custom_call.1} parent=0
    _
  %s4 = ssub.s32 1, %s2
  %s5 = scalar_select 0, %s4, %s2
  $region1: #{tpu_custom_call.1} parent=0
    #allocation2 [shape = 'u8[2048]{0}', space=vmem, size = 0x800, scoped, tag = 'input window, operand 0, single buffered']
    #allocation3 [shape = 's32[1]{0}', space=sflag, size = 0x4, scoped, tag = 'scoped memory for tpu_custom_call.1']
    #allocation4 [shape = 's32[1]{0}', space=sflag, size = 0x4, scoped, tag = 'scoped memory for tpu_custom_call.1']
    #allocation5 [shape = 'u8[2048]{0}', space=vmem, size = 0x800, scoped, tag = 'output window, operand 0, single buffered']
    %6 = vsyncpa [#allocation3], 0
    %7 = vsyncpa [#allocation4], 0
    // Predicated region
    $region2: #{tpu_custom_call.1} parent=1 // pred_check
      _
    $region3: #{tpu_custom_call.1} parent=1 // pred_check_branch
      %9 = sbr.rel (0) target = $region5
    $region4: #{tpu_custom_call.1} parent=1 // pred_region
      %s11 = ssub.s32 64, 64
      %12 = vsyncadd [#allocation3], %s11
      %s14 = sshll.u32 [#allocation2], 4
      %s15 = int_to_ptr.vmem [resolvable:$true] %s14
      %17 = dma.hbm_to_vmem [thread:$0]  %s0, 64, %s15, [#allocation3]
    $region5: #{tpu_custom_call.1} parent=1 // pred_fallthru
      _
    // Predicated region
    $region6: #{tpu_custom_call.1} parent=1 // pred_check
      _
    $region7: #{tpu_custom_call.1} parent=1 // pred_check_branch
      %19 = sbr.rel (0) target = $region9
    $region8: #{tpu_custom_call.1} parent=1 // pred_region
      %20 = dma.done [#allocation3], 64
    $region9: #{tpu_custom_call.1} parent=1 // pred_fallthru
      _
    %v21 = vld [vmem:[#allocation2] sm:$0xf]
    %v22 = vmul.f32 %v21, 0.5
    %v23 = vmul.f32 %v21, %v21
    %v24 = vmul.f32 %v23, %v21
    %v25 = vmul.f32 %v24, 0.044715
    %v26 = vadd.f32 %v21, %v25
    %v27 = vmul.f32 %v26, 0.7978846
    %v28 = vtanh.pop %v27
    %v29 = vadd.f32 %v28, 1.0
    %v30 = vmul.f32 %v22, %v29
    %v31 = vlaneseq
    %vm32 = vcmp.ge.s32.totalorder %v31, 0
    %vm33 = vcmp.lt.s32.totalorder %v31, 512
    %vm34 = vmand %vm32, %vm33
    %35 = vst.msk [vmem:[#allocation5] sm:$0xf] %vm34, %v30
    // Predicated region
    $region10: #{tpu_custom_call.1} parent=1 // pred_check
      _
    $region11: #{tpu_custom_call.1} parent=1 // pred_check_branch
      %37 = sbr.rel (0) target = $region13
    $region12: #{tpu_custom_call.1} parent=1 // pred_region
      %s39 = ssub.s32 64, 64
      %40 = vsyncadd [#allocation4], %s39
      %s42 = sshll.u32 [#allocation5], 4
      %s43 = int_to_ptr.vmem [resolvable:$true] %s42
      %45 = dma.vmem_to_hbm [thread:$0]  %s43, 64, %s1, [#allocation4]
    $region13: #{tpu_custom_call.1} parent=1 // pred_fallthru
      _
    // Predicated region
    $region14: #{tpu_custom_call.1} parent=1 // pred_check
      _
    $region15: #{tpu_custom_call.1} parent=1 // pred_check_branch
      %47 = sbr.rel (0) target = $region17
    $region16: #{tpu_custom_call.1} parent=1 // pred_region
      %48 = dma.done [#allocation4], 64
    $region17: #{tpu_custom_call.1} parent=1 // pred_fallthru
      _
    %49 = vsyncpa [#allocation3], 1
    %50 = vsyncpa [#allocation4], 1

</llo_original>
